<compile_context>
chip_gen: v7x
topology: tpu7x:2x2x1
jax: 0.10.0
libtpu: 0.0.40
codegen_flags: <defaults>
</compile_context>

<pallas_src>
import functools

import jax
import jax.numpy as jnp
from jax.experimental import pallas as pl
from jax.experimental.pallas import tpu as pltpu

LANES = 128
DEFAULT_BLOCK_M = 4096  # rows (of 128 lanes) per grid step; multiple of 8


def _copy_kernel(x_ref, o_ref):
    # Forward of GradiantReverse: identity (x.view_as(x)).
    o_ref[...] = x_ref[...]


def _make_scale_kernel(scale):
    scale = float(scale)

    def _scale_kernel(g_ref, o_ref):
        # Backward of GradiantReverse: dx = -lambd * grad_output.
        o_ref[...] = (g_ref[...].astype(jnp.float32) * scale).astype(o_ref.dtype)

    return _scale_kernel


def _run_elementwise(kernel, x, *, block_m=DEFAULT_BLOCK_M):
    """Run an elementwise kernel over x viewed as a lane-dense (rows, 128) slab."""
    shape, dtype, n = x.shape, x.dtype, x.size
    rows = pl.cdiv(n, LANES)

    flat = x.reshape(-1)
    pad = rows * LANES - n
    if pad:  # only the <128-element lane remainder; never a full extra copy
        flat = jnp.pad(flat, (0, pad))
    x2 = flat.reshape(rows, LANES)

    # Tile = whole array if it's small, else block_m rows (multiple of 8).
    bm = rows if rows <= block_m else block_m
    grid = (pl.cdiv(rows, bm),)

    out = pl.pallas_call(
        kernel,
        out_shape=jax.ShapeDtypeStruct((rows, LANES), dtype),
        grid_spec=pltpu.PrefetchScalarGridSpec(
            num_scalar_prefetch=0,
            grid=grid,
            in_specs=[pl.BlockSpec((bm, LANES), lambda i: (i, 0))],
            out_specs=pl.BlockSpec((bm, LANES), lambda i: (i, 0)),
        ),
        compiler_params=pltpu.CompilerParams(
            dimension_semantics=("parallel",),
        ),
    )(x2)

    return out.reshape(-1)[:n].reshape(shape)


@functools.partial(jax.custom_vjp, nondiff_argnums=(1,))
def gradient_reverse(x, lambd=1.0):
    return _run_elementwise(_copy_kernel, x)


def _grl_fwd(x, lambd):
    return _run_elementwise(_copy_kernel, x), None


def _grl_bwd(lambd, _res, g):
    return (_run_elementwise(_make_scale_kernel(-lambd), g),)


gradient_reverse.defvjp(_grl_fwd, _grl_bwd)


class GradiantReverseLayer:
    """JAX/Pallas equivalent of the PyTorch GradiantReverseLayer module."""

    def __init__(self, lambd=1.0):
        self.lambd = lambd

    def __call__(self, x):
        return gradient_reverse(x, self.lambd)


if __name__ == "__main__":
    key = jax.random.PRNGKey(0)
    x = jax.random.normal(key, (2, 4, 16, 16), jnp.float32)

    layer = GradiantReverseLayer(lambd=1.0)
    out = jax.block_until_ready(layer(x))

    assert out.shape == x.shape
    assert jnp.allclose(out, x)

    # Exercise the gradient-reversal backward path (Pallas scale kernel).
    g = jax.grad(lambda t: jnp.sum(gradient_reverse(t, 1.0)))(x)
    g = jax.block_until_ready(g)
    assert jnp.allclose(g, -jnp.ones_like(x))

    print("KERNEL_OK")
</pallas_src>

<mosaic_0001>
module attributes {stable_mosaic.version = 11 : i64} {
  func.func @_copy_kernel(%arg0: i32, %arg1: memref<16x128xf32, #tpu.memory_space<vmem>>, %arg2: memref<16x128xf32, #tpu.memory_space<vmem>>) attributes {dimension_semantics = [#tpu.dimension_semantics<parallel>], iteration_bounds = array<i64: 1>, scalar_prefetch = 0 : i64, scratch_operands = 0 : i64, tpu.core_type = #tpu.core_type<tc>, window_params = [{transform_indices = @transform_0, window_bounds = array<i64: 16, 128>}, {transform_indices = @transform_1, window_bounds = array<i64: 16, 128>}]} {
    %c0 = arith.constant 0 : index
    %c0_0 = arith.constant 0 : index
    %0 = vector.load %arg1[%c0, %c0_0] : memref<16x128xf32, #tpu.memory_space<vmem>>, vector<16x128xf32>
    %c0_1 = arith.constant 0 : index
    %c0_2 = arith.constant 0 : index
    %1 = vector.load %arg2[%c0_1, %c0_2] : memref<16x128xf32, #tpu.memory_space<vmem>>, vector<16x128xf32>
    tpu.vector_store %arg2[%c0_1, %c0_2], %0 {strides = array<i32>} : memref<16x128xf32, #tpu.memory_space<vmem>>, vector<16x128xf32>,
    return
  }
  func.func @transform_0(%arg0: i32) -> (i32, i32) {
    %c0_i32 = arith.constant 0 : i32
    %c0_i32_0 = arith.constant 0 : i32
    return %arg0, %c0_i32 : i32, i32
  }
  func.func @transform_1(%arg0: i32) -> (i32, i32) {
    %c0_i32 = arith.constant 0 : i32
    %c0_i32_0 = arith.constant 0 : i32
    return %arg0, %c0_i32 : i32, i32
  }
}

</mosaic_0001>

<llo_original>
// kernel: tpu_custom_call.1
$region0: #{tpu_custom_call.1}
  #allocation0 [shape = 'u32[]', space=smem, size = 0x4, offset = 0x4, fixed_abs, tag = 'smem constant byte address 0x4 - core index']
  #allocation1 [shape = 'u32[144,128]{1,0:T(1,128)}', space=vmem, size = 0x12000, scoped, tag = 'internal scratch']
  %s0 = inlined_call_operand.hbm [shape: f32[16,128], index: 0, kind: input, shape index: {}]
  %s1 = inlined_call_operand.hbm [shape: f32[16,128], index: 1, kind: output, shape index: {}]
  %s2 = sld [smem:[#allocation0]]
  $region18: #{tpu_custom_call.1} parent=0
    _
  %s4 = ssub.s32 1, %s2
  %s5 = scalar_select 0, %s4, %s2
  $region1: #{tpu_custom_call.1} parent=0
    #allocation2 [shape = 'u8[8192]{0}', space=vmem, size = 0x2000, scoped, tag = 'input window, operand 0, single buffered']
    #allocation3 [shape = 's32[1]{0}', space=sflag, size = 0x4, scoped, tag = 'scoped memory for tpu_custom_call.1']
    #allocation4 [shape = 's32[1]{0}', space=sflag, size = 0x4, scoped, tag = 'scoped memory for tpu_custom_call.1']
    #allocation5 [shape = 'u8[8192]{0}', space=vmem, size = 0x2000, scoped, tag = 'output window, operand 0, single buffered']
    %6 = vsyncpa [#allocation3], 0
    %7 = vsyncpa [#allocation4], 0
    // Predicated region
    $region2: #{tpu_custom_call.1} parent=1 // pred_check
      _
    $region3: #{tpu_custom_call.1} parent=1 // pred_check_branch
      %9 = sbr.rel (0) target = $region5
    $region4: #{tpu_custom_call.1} parent=1 // pred_region
      %s11 = ssub.s32 256, 256
      %12 = vsyncadd [#allocation3], %s11
      %s13 = sshll.u32 [#allocation2], 4
      %s14 = int_to_ptr.vmem [resolvable:$true] %s13
      %19 = dma.hbm_to_vmem [thread:$0]  %s0, 256, %s14, [#allocation3], 128, 128, 8
    $region5: #{tpu_custom_call.1} parent=1 // pred_fallthru
      _
    // Predicated region
    $region6: #{tpu_custom_call.1} parent=1 // pred_check
      _
    $region7: #{tpu_custom_call.1} parent=1 // pred_check_branch
      %21 = sbr.rel (0) target = $region9
    $region8: #{tpu_custom_call.1} parent=1 // pred_region
      %22 = dma.done [#allocation3], 256
    $region9: #{tpu_custom_call.1} parent=1 // pred_fallthru
      _
    %v23 = vld [vmem:[#allocation2] sm:$0xff]
    %v24 = vld [vmem:[#allocation2 + $0x8] sm:$0xff]
    %25 = vst [vmem:[#allocation5] sm:$0xff] %v23
    %26 = vst [vmem:[#allocation5 + $0x8] sm:$0xff] %v24
    // Predicated region
    $region10: #{tpu_custom_call.1} parent=1 // pred_check
      _
    $region11: #{tpu_custom_call.1} parent=1 // pred_check_branch
      %28 = sbr.rel (0) target = $region13
    $region12: #{tpu_custom_call.1} parent=1 // pred_region
      %s30 = ssub.s32 256, 256
      %31 = vsyncadd [#allocation4], %s30
      %s32 = sshll.u32 [#allocation5], 4
      %s33 = int_to_ptr.vmem [resolvable:$true] %s32
      %38 = dma.vmem_to_hbm [thread:$0]  %s33, 256, %s1, [#allocation4], 128, 128, 8
    $region13: #{tpu_custom_call.1} parent=1 // pred_fallthru
      _
    // Predicated region
    $region14: #{tpu_custom_call.1} parent=1 // pred_check
      _
    $region15: #{tpu_custom_call.1} parent=1 // pred_check_branch
      %40 = sbr.rel (0) target = $region17
    $region16: #{tpu_custom_call.1} parent=1 // pred_region
      %41 = dma.done [#allocation4], 256
    $region17: #{tpu_custom_call.1} parent=1 // pred_fallthru
      _
    %42 = vsyncpa [#allocation3], 1
    %43 = vsyncpa [#allocation4], 1

</llo_original>
